<compile_context>
chip_gen: v7x
topology: tpu7x:2x2x1
jax: 0.10.0
libtpu: 0.0.40
codegen_flags: <defaults>
</compile_context>

<pallas_src>
import functools

import jax
import jax.numpy as jnp
from jax.experimental import pallas as pl
from jax.experimental.pallas import tpu as pltpu


def _round_up(x: int, m: int) -> int:
    return -(-x // m) * m


def _channel_sum_kernel(x_ref, o_ref, *, hw, chunk, n_chunks, has_tail):
    # x_ref: (R, chunk) input block, R = N*3, spatial on the lane axis.
    # o_ref: (1, R, 1) f32 partial-sum block, resident across the chunk axis.
    s = pl.program_id(0)   # spatial split (parallel)
    c = pl.program_id(1)   # chunk within split (reduction axis, last)

    @pl.when(c == 0)
    def _():
        o_ref[...] = jnp.zeros_like(o_ref)

    x = x_ref[...]
    if has_tail:
        # The globally-last chunk is partial; out-of-bounds lanes are
        # undefined and must be masked before the reduce.
        gstart = (s * n_chunks + c) * chunk
        lane = jax.lax.broadcasted_iota(jnp.int32, x.shape, 1)
        x = jnp.where(lane < (hw - gstart), x, 0)

    # One fused lane reduction per step, accumulated in f32.
    o_ref[...] += jnp.sum(x, axis=-1, keepdims=True, dtype=jnp.float32)[None]


def color_cast_loss(enhanced_image: jax.Array, *, target_block_bytes: int = 4 << 20) -> jax.Array:
    """Pallas equivalent of ColorCastLoss.forward. Returns a scalar f32 loss."""
    assert enhanced_image.ndim == 4, "Input must be a 4D tensor (N, C, H, W)"
    assert enhanced_image.shape[1] == 3, "Input must have 3 color channels (RGB)"
    N, C, H, W = enhanced_image.shape
    HW = H * W
    R = N * C
    itemsize = jnp.dtype(enhanced_image.dtype).itemsize

    # ---- static tiling ------------------------------------------------------
    sub_pack = max(1, 4 // itemsize)           # sublane packing: f32->1, bf16->2, i8->4
    rows_pad = _round_up(R, 8 * sub_pack)      # real sublane-padded row footprint
    max_chunk = max(128, (target_block_bytes // (rows_pad * itemsize)) // 128 * 128)

    if HW <= max_chunk:
        chunk = HW                             # full dim: 128-multiple rule not required
        total_chunks = 1
    else:
        chunk = max_chunk                      # multiple of 128
        total_chunks = pl.cdiv(HW, chunk)
        if total_chunks % 2:                   # try for an even chunk count so v7x
            cand = _round_up(pl.cdiv(HW, total_chunks + 1), 128)   # can use 2 splits
            if cand >= 128 and pl.cdiv(HW, cand) % 2 == 0:
                chunk = cand
                total_chunks = pl.cdiv(HW, chunk)

    n_splits = 2 if (total_chunks >= 2 and total_chunks % 2 == 0) else 1
    n_chunks = total_chunks // n_splits
    has_tail = chunk * total_chunks != HW

    block_bytes = rows_pad * chunk * itemsize
    vmem_limit_bytes = int(min(100 << 20, max(2 * block_bytes + (4 << 20), 16 << 20)))

    # ---- layout plumbing (contiguous reshape, no data movement) -------------
    x2d = enhanced_image.reshape(R, HW)

    cost = pl.CostEstimate(
        flops=N * C * HW,
        transcendentals=0,
        bytes_accessed=R * HW * itemsize + n_splits * R * 4,
    )

    kernel = functools.partial(
        _channel_sum_kernel, hw=HW, chunk=chunk, n_chunks=n_chunks, has_tail=has_tail)

    partial_sums = pl.pallas_call(
        kernel,
        out_shape=jax.ShapeDtypeStruct((n_splits, R, 1), jnp.float32),
        grid_spec=pltpu.PrefetchScalarGridSpec(
            num_scalar_prefetch=0,
            grid=(n_splits, n_chunks),
            in_specs=[
                pl.BlockSpec((R, chunk), lambda s, c: (0, s * n_chunks + c)),
            ],
            out_specs=pl.BlockSpec((1, R, 1), lambda s, c: (s, 0, 0)),
        ),
        compiler_params=pltpu.CompilerParams(
            dimension_semantics=("parallel", "arbitrary"),
            vmem_limit_bytes=vmem_limit_bytes,
        ),
        cost_estimate=cost,
    )(x2d)

    # ---- O(N) glue: per-image channel means, pairwise squared diffs ---------
    means = jnp.sum(partial_sums[:, :, 0], axis=0).reshape(N, C) / float(HW)
    loss = 0.0
    for c1, c2 in ((0, 1), (1, 2), (2, 0)):
        loss = loss + jnp.mean((means[:, c1] - means[:, c2]) ** 2)
    return loss / 3.0


def _reference(x: jax.Array) -> jax.Array:
    means = jnp.mean(x.astype(jnp.float32), axis=(2, 3))  # (N, 3)
    ref = 0.0
    for c1, c2 in ((0, 1), (1, 2), (2, 0)):
        ref = ref + jnp.mean((means[:, c1] - means[:, c2]) ** 2)
    return ref / 3.0


if __name__ == "__main__":
    key = jax.random.PRNGKey(0)

    # Main small case (single-block path).
    x1 = jax.random.uniform(key, (2, 3, 16, 16), dtype=jnp.float32)
    loss1 = jax.block_until_ready(color_cast_loss(x1))
    assert jnp.allclose(loss1, _reference(x1), rtol=1e-5, atol=1e-6), (loss1, _reference(x1))

    # Exercise the multi-chunk + ragged-tail masking path with a tiny block budget.
    x2 = jax.random.uniform(jax.random.PRNGKey(1), (2, 3, 24, 24), dtype=jnp.float32)
    loss2 = jax.block_until_ready(color_cast_loss(x2, target_block_bytes=2048))
    assert jnp.allclose(loss2, _reference(x2), rtol=1e-5, atol=1e-6), (loss2, _reference(x2))

    # Exercise the two-split (parallel axis) path.
    x3 = jax.random.uniform(jax.random.PRNGKey(2), (1, 3, 32, 32), dtype=jnp.float32)
    loss3 = jax.block_until_ready(color_cast_loss(x3, target_block_bytes=2048))
    assert jnp.allclose(loss3, _reference(x3), rtol=1e-5, atol=1e-6), (loss3, _reference(x3))

    print("KERNEL_OK")
</pallas_src>

<mosaic_0001>
module attributes {stable_mosaic.version = 11 : i64} {
  func.func @_channel_sum_kernel(%arg0: i32, %arg1: i32, %arg2: memref<6x256xf32, #tpu.memory_space<vmem>>, %arg3: memref<1x6x1xf32, #tpu.memory_space<vmem>>) attributes {dimension_semantics = [#tpu.dimension_semantics<parallel>, #tpu.dimension_semantics<arbitrary>], iteration_bounds = array<i64: 1, 1>, scalar_prefetch = 0 : i64, scratch_operands = 0 : i64, tpu.core_type = #tpu.core_type<tc>, window_params = [{transform_indices = @transform_0, window_bounds = array<i64: 6, 256>}, {transform_indices = @transform_1, window_bounds = array<i64: 1, 6, 1>}]} {
    %c0_i32 = arith.constant 0 : i32
    %0 = arith.cmpi eq, %arg1, %c0_i32 : i32
    %1 = arith.extui %0 : i1 to i32
    %c0_i32_0 = arith.constant 0 : i32
    %2 = arith.cmpi ne, %1, %c0_i32_0 : i32
    scf.if %2 {
      %cst_8 = arith.constant 0.000000e+00 : f32
      %10 = vector.broadcast %cst_8 : f32 to vector<1x6x1xf32>
      %c0_9 = arith.constant 0 : index
      %c0_10 = arith.constant 0 : index
      %c0_11 = arith.constant 0 : index
      %11 = vector.load %arg3[%c0_9, %c0_10, %c0_11] : memref<1x6x1xf32, #tpu.memory_space<vmem>>, vector<1x6x1xf32>
      tpu.vector_store %arg3[%c0_9, %c0_10, %c0_11], %10 {strides = array<i32>} : memref<1x6x1xf32, #tpu.memory_space<vmem>>, vector<1x6x1xf32>,
    } else {
    }
    %c0 = arith.constant 0 : index
    %c0_1 = arith.constant 0 : index
    %3 = vector.load %arg2[%c0, %c0_1] : memref<6x256xf32, #tpu.memory_space<vmem>>, vector<6x256xf32>
    %c0_2 = arith.constant 0 : index
    %c0_3 = arith.constant 0 : index
    %c0_4 = arith.constant 0 : index
    %4 = vector.load %arg3[%c0_2, %c0_3, %c0_4] : memref<1x6x1xf32, #tpu.memory_space<vmem>>, vector<1x6x1xf32>
    %cst = arith.constant dense<0.000000e+00> : vector<6xf32>
    %5 = vector.multi_reduction <add>, %3, %cst [1] : vector<6x256xf32> to vector<6xf32>
    %6 = vector.shape_cast %5 : vector<6xf32> to vector<6x1xf32>
    %7 = vector.shape_cast %6 : vector<6x1xf32> to vector<1x6x1xf32>
    %8 = arith.addf %4, %7 : vector<1x6x1xf32>
    %c0_5 = arith.constant 0 : index
    %c0_6 = arith.constant 0 : index
    %c0_7 = arith.constant 0 : index
    %9 = vector.load %arg3[%c0_5, %c0_6, %c0_7] : memref<1x6x1xf32, #tpu.memory_space<vmem>>, vector<1x6x1xf32>
    tpu.vector_store %arg3[%c0_5, %c0_6, %c0_7], %8 {strides = array<i32>} : memref<1x6x1xf32, #tpu.memory_space<vmem>>, vector<1x6x1xf32>,
    return
  }
  func.func @transform_0(%arg0: i32, %arg1: i32) -> (i32, i32) {
    %c1_i32 = arith.constant 1 : i32
    %0 = arith.muli %arg0, %c1_i32 : i32
    %1 = arith.addi %0, %arg1 : i32
    %c0_i32 = arith.constant 0 : i32
    %c0_i32_0 = arith.constant 0 : i32
    return %c0_i32, %1 : i32, i32
  }
  func.func @transform_1(%arg0: i32, %arg1: i32) -> (i32, i32, i32) {
    %c0_i32 = arith.constant 0 : i32
    %c0_i32_0 = arith.constant 0 : i32
    %c0_i32_1 = arith.constant 0 : i32
    return %arg0, %c0_i32, %c0_i32_0 : i32, i32, i32
  }
}

</mosaic_0001>

<llo_original>
// kernel: tpu_custom_call.1
$region0: #{tpu_custom_call.1}
  #allocation0 [shape = 'u32[]', space=smem, size = 0x4, offset = 0x4, fixed_abs, tag = 'smem constant byte address 0x4 - core index']
  #allocation1 [shape = 'u32[144,128]{1,0:T(1,128)}', space=vmem, size = 0x12000, scoped, tag = 'internal scratch']
  %s0 = inlined_call_operand.hbm [shape: f32[6,256], index: 0, kind: input, shape index: {}]
  %s1 = inlined_call_operand.vmem [shape: f32[1,6,1], index: 1, kind: output, shape index: {}]
  %s2 = sld [smem:[#allocation0]]
  $region22: #{tpu_custom_call.1} parent=0
    _
  %s4 = ssub.s32 1, %s2
  %s5 = scalar_select 0, %s4, %s2
  $region1: #{tpu_custom_call.1} parent=0
    #allocation2 [shape = 'u8[8192]{0}', space=vmem, size = 0x2000, scoped, tag = 'input window, operand 0, single buffered']
    #allocation3 [shape = 's32[1]{0}', space=sflag, size = 0x4, scoped, tag = 'scoped memory for tpu_custom_call.1']
    %6 = vsyncpa [#allocation3], 0
    // Predicated region
    $region2: #{tpu_custom_call.1} parent=1 // pred_check
      _
    $region3: #{tpu_custom_call.1} parent=1 // pred_check_branch
      %8 = sbr.rel (0) target = $region5
    $region4: #{tpu_custom_call.1} parent=1 // pred_region
      %s9 = sadd.s32 0, 0
      %s10 = smul.u32 2, %s9
      %s12 = ssub.s32 256, 256
      %13 = vsyncadd [#allocation3], %s12
      %s14 = smul.addr %s10, 128
      %s15 = scalar_lea.hbm %s0, %s14
      %s17 = sshll.u32 [#allocation2], 4
      %s18 = int_to_ptr.vmem [resolvable:$true] %s17
      %20 = dma.hbm_to_vmem [thread:$0]  %s15, 256, %s18, [#allocation3]
    $region5: #{tpu_custom_call.1} parent=1 // pred_fallthru
      _
    // Predicated region
    $region6: #{tpu_custom_call.1} parent=1 // pred_check
      _
    $region7: #{tpu_custom_call.1} parent=1 // pred_check_branch
      %22 = sbr.rel (0) target = $region9
    $region8: #{tpu_custom_call.1} parent=1 // pred_region
      %23 = dma.done [#allocation3], 256
    $region9: #{tpu_custom_call.1} parent=1 // pred_fallthru
      _
    %s24 = sadd.s32 0, 0
    %s25 = smul.u32 2, %s24
    %p26 = scmp.eq.s32.totalorder 0, 0
    // Predicated region
    $region10: #{tpu_custom_call.1} parent=1 // pred_check
      %p27 = pneg %p26
    $region11: #{tpu_custom_call.1} parent=1 // pred_check_branch
      %29 = sbr.rel (%p27) target = $region13
    $region12: #{tpu_custom_call.1} parent=1 // pred_region
      %vm30 = vcmask 5120
      %31 = vst.msk [vmem:[%s1] sm:$0x3f] %vm30, 0.0
    $region13: #{tpu_custom_call.1} parent=1 // pred_fallthru
      _
    %v32 = vld [vmem:[#allocation2] sm:$0x3f]
    %v33 = vld [vmem:[#allocation2 + $0x8] sm:$0x3f]
    %v34 = vld [vmem:[%s1] sm:$0x3f]
    %vm35 = vcmask 1045504
    %v36 = vsel %vm35, %v32, 0.0
    %v37 = vsel %vm35, %v33, 0.0
    %v38 = vadd.f32 %v36, %v37
    %39 = vadd.xlane.f32.xlu0 %v38
    %v40 = vpop.xlane.xlu0 %39
    %v41 = vadd.f32 %v34, %v40
    %vm42 = vcmask 5120
    %43 = vst.msk [vmem:[%s1] sm:$0x3f] %vm42, %v41
    // Predicated region
    $region14: #{tpu_custom_call.1} parent=1 // pred_check
      _
    $region15: #{tpu_custom_call.1} parent=1 // pred_check_branch
      %45 = sbr.rel (0) target = $region17
    $region16: #{tpu_custom_call.1} parent=1 // pred_region
      _
    $region17: #{tpu_custom_call.1} parent=1 // pred_fallthru
      _
    // Predicated region
    $region18: #{tpu_custom_call.1} parent=1 // pred_check
      _
    $region19: #{tpu_custom_call.1} parent=1 // pred_check_branch
      %47 = sbr.rel (0) target = $region21
    $region20: #{tpu_custom_call.1} parent=1 // pred_region
      _
    $region21: #{tpu_custom_call.1} parent=1 // pred_fallthru
      _
    %48 = vsyncpa [#allocation3], 1

</llo_original>
